<compile_context>
chip_gen: v7x
topology: tpu7x:2x2x1
jax: 0.10.0
libtpu: 0.0.40
codegen_flags: <defaults>
</compile_context>

<pallas_src>
import jax
import jax.numpy as jnp
from jax.experimental import pallas as pl
from jax.experimental.pallas import tpu as pltpu


def _round_up(a, b):
    return (a + b - 1) // b * b


def symbolic_kan_kernel(x_ref, w_ref, b_ref, y_ref, post_ref):
    """Blocks (batch on the lane axis):
       x_ref    (I, TB)      input tile (f32)
       w_ref    (O, I, 1)    fused weight  = mask*a2*a0        (resident, fetched once)
       b_ref    (O, I, 1)    fused bias    = mask*(a2*a1 + a3) (resident, fetched once)
       y_ref    (O, TB)      per-batch sums (f32)
       post_ref (O, I, TB)   postacts tile, stored in the output dtype
    """
    x = x_ref[...]                                            # (I, TB)
    post = w_ref[...] * x[None, :, :] + b_ref[...]            # (O, I, TB) f32, lane-dense
    post_ref[...] = post.astype(post_ref.dtype)
    # y[o, b] = sum_i post[o, i, b]; exact f32 sum of the same values => y == sum(postacts).
    y_ref[...] = jnp.sum(post, axis=1).astype(y_ref.dtype)


def _pick_tb(batch, out_dim, in_dim, post_itemsize, tb=None):
    """Batch-tile (lane) width: multiple of 128, VMEM-bounded, >=2 tiles when batch allows."""
    tb_cap = _round_up(batch, 128)                  # never tile wider than the padded batch
    if tb is not None:
        return min(_round_up(tb, 128), tb_cap)
    i_sub = _round_up(in_dim, 8)
    o_sub = _round_up(out_dim, 8)
    # Double-buffered streaming blocks + live f32 value, in bytes per batch lane.
    per_lane = (2 * out_dim * i_sub * post_itemsize   # postacts out block
                + 2 * i_sub * 4                       # x in block
                + 2 * o_sub * 4                       # y out block
                + out_dim * i_sub * 4)                # live f32 postacts value
    vmem_budget = 24 * 1024 * 1024                    # safe under every generation's scoped VMEM
    tb = max(128, min(512, (vmem_budget // max(per_lane, 1)) // 128 * 128))
    if batch > 128:
        # Keep >=2 batch tiles so both TensorCores of a megacore / v7x chip get work.
        tb = min(tb, max(128, _round_up((batch + 1) // 2, 128)))
    return min(tb, tb_cap)


def symbolic_kanlayer_forward(x, affine, mask, *, tb=None):
    """x: (batch, in_dim); affine: (out_dim, in_dim, 4); mask: (out_dim, in_dim).
       Returns (y (batch, out_dim), postacts (batch, out_dim, in_dim)) in x.dtype."""
    batch, in_dim = x.shape
    out_dim = mask.shape[0]
    out_dtype = x.dtype

    # Fuse the (tiny, unpadded) affine planes once:  postacts = w*x + bias   (funs == identity).
    a0, a1, a2, a3 = (affine[..., k].astype(jnp.float32) for k in range(4))
    m = mask.astype(jnp.float32)
    w = (m * a2 * a0)[:, :, None]                              # (O, I, 1)
    bias = (m * (a2 * a1 + a3))[:, :, None]                    # (O, I, 1)

    post_dtype = out_dtype
    TB = _pick_tb(batch, out_dim, in_dim, jnp.dtype(post_dtype).itemsize, tb)
    B_pad = _round_up(batch, TB)

    # Batch on the last (lane) axis; zero-pad only the batch tail.
    x_t = jnp.zeros((in_dim, B_pad), jnp.float32).at[:, :batch].set(x.astype(jnp.float32).T)

    grid = (B_pad // TB,)
    grid_spec = pltpu.PrefetchScalarGridSpec(
        num_scalar_prefetch=0,
        grid=grid,
        in_specs=[
            pl.BlockSpec((in_dim, TB), lambda i: (0, i)),          # x: streams per batch tile
            pl.BlockSpec((out_dim, in_dim, 1), lambda i: (0, 0, 0)),   # w: resident
            pl.BlockSpec((out_dim, in_dim, 1), lambda i: (0, 0, 0)),   # bias: resident
        ],
        out_specs=[
            pl.BlockSpec((out_dim, TB), lambda i: (0, i)),             # y (lane-dense)
            pl.BlockSpec((out_dim, in_dim, TB), lambda i: (0, 0, i)),  # postacts (lane-dense)
        ],
    )

    y_t, post_t = pl.pallas_call(
        symbolic_kan_kernel,
        out_shape=(
            jax.ShapeDtypeStruct((out_dim, B_pad), jnp.float32),
            jax.ShapeDtypeStruct((out_dim, in_dim, B_pad), post_dtype),
        ),
        grid_spec=grid_spec,
        compiler_params=pltpu.CompilerParams(
            dimension_semantics=("parallel",),
            # Blocks are small in this layout; 32 MiB is safe on v5e/v6e and on v7x (64 MiB phys).
            vmem_limit_bytes=32 * 1024 * 1024,
        ),
    )(x_t, w, bias)

    y = y_t[:, :batch].T.astype(out_dtype)                     # tiny
    # Restore the module's (batch, out_dim, in_dim) order; the only extra pass over postacts.
    postacts = jnp.transpose(post_t[:, :, :batch], (2, 0, 1))
    return y, postacts


def reference_forward(x, affine, mask):
    """Pure-JAX replica of the PyTorch forward (funs == identity)."""
    xb = x[:, None, :]                                         # (B, 1, I)
    a0, a1, a2, a3 = (affine[..., k][None] for k in range(4))
    post = mask[None] * (a2 * (a0 * xb + a1) + a3)             # (B, O, I)
    y = jnp.sum(post, axis=2)                                  # (B, O)
    return y, post


def _run_case(key, batch, in_dim, out_dim, tb=None, dtype=jnp.float32):
    kx, ka, km = jax.random.split(key, 3)
    # Module __init__ uses zeros (trivial output); use random params to exercise the math.
    x = jax.random.normal(kx, (batch, in_dim), dtype=jnp.float32).astype(dtype)
    affine = jax.random.normal(ka, (out_dim, in_dim, 4), dtype=jnp.float32)
    mask = (jax.random.uniform(km, (out_dim, in_dim)) > 0.3).astype(jnp.float32)

    y, postacts = symbolic_kanlayer_forward(x, affine, mask, tb=tb)
    y = jax.block_until_ready(y)
    postacts = jax.block_until_ready(postacts)

    y_ref, post_ref = reference_forward(x.astype(jnp.float32), affine, mask)
    assert y.shape == (batch, out_dim)
    assert postacts.shape == (batch, out_dim, in_dim)
    assert y.dtype == dtype and postacts.dtype == dtype
    tol = 1e-5 if dtype == jnp.float32 else 3e-2
    assert jnp.allclose(y.astype(jnp.float32), y_ref, atol=tol, rtol=tol)
    assert jnp.allclose(postacts.astype(jnp.float32), post_ref, atol=tol, rtol=tol)


if __name__ == "__main__":
    key = jax.random.PRNGKey(0)
    k1, k2, k3 = jax.random.split(key, 3)

    # Module-default shapes (single batch tile).
    _run_case(k1, batch=8, in_dim=3, out_dim=2)
    # Ragged shapes exercising a multi-tile batch grid with an explicit tile override.
    _run_case(k2, batch=300, in_dim=5, out_dim=6, tb=128)
    # bf16 input: postacts stored in bf16 inside the kernel; auto TB picks >=2 tiles.
    _run_case(k3, batch=256, in_dim=3, out_dim=2, dtype=jnp.bfloat16)

    print("KERNEL_OK")
</pallas_src>

<mosaic_0001>
module attributes {stable_mosaic.version = 11 : i64} {
  func.func @symbolic_kan_kernel(%arg0: i32, %arg1: memref<3x128xf32, #tpu.memory_space<vmem>>, %arg2: memref<2x3x1xf32, #tpu.memory_space<vmem>>, %arg3: memref<2x3x1xf32, #tpu.memory_space<vmem>>, %arg4: memref<2x128xf32, #tpu.memory_space<vmem>>, %arg5: memref<2x3x128xf32, #tpu.memory_space<vmem>>) attributes {dimension_semantics = [#tpu.dimension_semantics<parallel>], iteration_bounds = array<i64: 1>, scalar_prefetch = 0 : i64, scratch_operands = 0 : i64, tpu.core_type = #tpu.core_type<tc>, window_params = [{transform_indices = @transform_0, window_bounds = array<i64: 3, 128>}, {pipeline_mode = #tpu.pipeline_mode<synchronous>, transform_indices = @transform_1, window_bounds = array<i64: 2, 3, 1>}, {pipeline_mode = #tpu.pipeline_mode<synchronous>, transform_indices = @transform_2, window_bounds = array<i64: 2, 3, 1>}, {transform_indices = @transform_3, window_bounds = array<i64: 2, 128>}, {transform_indices = @transform_4, window_bounds = array<i64: 2, 3, 128>}]} {
    %c0 = arith.constant 0 : index
    %c0_0 = arith.constant 0 : index
    %0 = vector.load %arg1[%c0, %c0_0] : memref<3x128xf32, #tpu.memory_space<vmem>>, vector<3x128xf32>
    %c0_1 = arith.constant 0 : index
    %c0_2 = arith.constant 0 : index
    %c0_3 = arith.constant 0 : index
    %1 = vector.load %arg2[%c0_1, %c0_2, %c0_3] : memref<2x3x1xf32, #tpu.memory_space<vmem>>, vector<2x3x1xf32>
    %2 = vector.shape_cast %0 : vector<3x128xf32> to vector<1x3x128xf32>
    %3 = vector.broadcast %1 : vector<2x3x1xf32> to vector<2x3x128xf32>
    %4 = vector.broadcast %2 : vector<1x3x128xf32> to vector<2x3x128xf32>
    %5 = arith.mulf %3, %4 : vector<2x3x128xf32>
    %c0_4 = arith.constant 0 : index
    %c0_5 = arith.constant 0 : index
    %c0_6 = arith.constant 0 : index
    %6 = vector.load %arg3[%c0_4, %c0_5, %c0_6] : memref<2x3x1xf32, #tpu.memory_space<vmem>>, vector<2x3x1xf32>
    %7 = vector.broadcast %6 : vector<2x3x1xf32> to vector<2x3x128xf32>
    %8 = arith.addf %5, %7 : vector<2x3x128xf32>
    %c0_7 = arith.constant 0 : index
    %c0_8 = arith.constant 0 : index
    %c0_9 = arith.constant 0 : index
    %9 = vector.load %arg5[%c0_7, %c0_8, %c0_9] : memref<2x3x128xf32, #tpu.memory_space<vmem>>, vector<2x3x128xf32>
    tpu.vector_store %arg5[%c0_7, %c0_8, %c0_9], %8 {strides = array<i32>} : memref<2x3x128xf32, #tpu.memory_space<vmem>>, vector<2x3x128xf32>,
    %cst = arith.constant dense<0.000000e+00> : vector<2x128xf32>
    %10 = vector.multi_reduction <add>, %8, %cst [1] : vector<2x3x128xf32> to vector<2x128xf32>
    %c0_10 = arith.constant 0 : index
    %c0_11 = arith.constant 0 : index
    %11 = vector.load %arg4[%c0_10, %c0_11] : memref<2x128xf32, #tpu.memory_space<vmem>>, vector<2x128xf32>
    tpu.vector_store %arg4[%c0_10, %c0_11], %10 {strides = array<i32>} : memref<2x128xf32, #tpu.memory_space<vmem>>, vector<2x128xf32>,
    return
  }
  func.func @transform_0(%arg0: i32) -> (i32, i32) {
    %c0_i32 = arith.constant 0 : i32
    %c0_i32_0 = arith.constant 0 : i32
    return %c0_i32, %arg0 : i32, i32
  }
  func.func @transform_1(%arg0: i32) -> (i32, i32, i32) {
    %c0_i32 = arith.constant 0 : i32
    %c0_i32_0 = arith.constant 0 : i32
    %c0_i32_1 = arith.constant 0 : i32
    %c0_i32_2 = arith.constant 0 : i32
    return %c0_i32, %c0_i32_0, %c0_i32_1 : i32, i32, i32
  }
  func.func @transform_2(%arg0: i32) -> (i32, i32, i32) {
    %c0_i32 = arith.constant 0 : i32
    %c0_i32_0 = arith.constant 0 : i32
    %c0_i32_1 = arith.constant 0 : i32
    %c0_i32_2 = arith.constant 0 : i32
    return %c0_i32, %c0_i32_0, %c0_i32_1 : i32, i32, i32
  }
  func.func @transform_3(%arg0: i32) -> (i32, i32) {
    %c0_i32 = arith.constant 0 : i32
    %c0_i32_0 = arith.constant 0 : i32
    return %c0_i32, %arg0 : i32, i32
  }
  func.func @transform_4(%arg0: i32) -> (i32, i32, i32) {
    %c0_i32 = arith.constant 0 : i32
    %c0_i32_0 = arith.constant 0 : i32
    %c0_i32_1 = arith.constant 0 : i32
    return %c0_i32, %c0_i32_0, %arg0 : i32, i32, i32
  }
}

</mosaic_0001>

<llo_original>
// kernel: tpu_custom_call.1
$region0: #{tpu_custom_call.1}
  #allocation0 [shape = 'u32[]', space=smem, size = 0x4, offset = 0x4, fixed_abs, tag = 'smem constant byte address 0x4 - core index']
  #allocation1 [shape = 'u32[144,128]{1,0:T(1,128)}', space=vmem, size = 0x12000, scoped, tag = 'internal scratch']
  %s0 = inlined_call_operand.vmem [shape: f32[3,128], index: 0, kind: input, shape index: {}]
  %s1 = inlined_call_operand.vmem [shape: f32[2,3,1], index: 1, kind: input, shape index: {}]
  %s2 = inlined_call_operand.vmem [shape: f32[2,3,1], index: 2, kind: input, shape index: {}]
  %s3 = inlined_call_operand.hbm [shape: f32[2,128], index: 3, kind: output, shape index: {0}]
  %s4 = inlined_call_operand.vmem [shape: f32[2,3,128], index: 4, kind: output, shape index: {1}]
  %5 = xla_tuple %s3, %s4
  %s6 = sld [smem:[#allocation0]]
  $region30: #{tpu_custom_call.1} parent=0
    _
  %s8 = ssub.s32 1, %s6
  %s9 = scalar_select 0, %s8, %s6
  $region1: #{tpu_custom_call.1} parent=0
    #allocation2 [shape = 'u8[1024]{0}', space=vmem, size = 0x400, scoped, tag = 'output window, operand 0, single buffered']
    #allocation3 [shape = 's32[1]{0}', space=sflag, size = 0x4, scoped, tag = 'scoped memory for tpu_custom_call.1']
    %10 = vsyncpa [#allocation3], 0
    // Predicated region
    $region2: #{tpu_custom_call.1} parent=1 // pred_check
      _
    $region3: #{tpu_custom_call.1} parent=1 // pred_check_branch
      %12 = sbr.rel (0) target = $region5
    $region4: #{tpu_custom_call.1} parent=1 // pred_region
      _
    $region5: #{tpu_custom_call.1} parent=1 // pred_fallthru
      _
    // Predicated region
    $region6: #{tpu_custom_call.1} parent=1 // pred_check
      _
    $region7: #{tpu_custom_call.1} parent=1 // pred_check_branch
      %14 = sbr.rel (0) target = $region9
    $region8: #{tpu_custom_call.1} parent=1 // pred_region
      _
    $region9: #{tpu_custom_call.1} parent=1 // pred_fallthru
      _
    // Predicated region
    $region10: #{tpu_custom_call.1} parent=1 // pred_check
      _
    $region11: #{tpu_custom_call.1} parent=1 // pred_check_branch
      %16 = sbr.rel (0) target = $region13
    $region12: #{tpu_custom_call.1} parent=1 // pred_region
      _
    $region13: #{tpu_custom_call.1} parent=1 // pred_fallthru
      _
    %v17 = vld [vmem:[%s0] sm:$0x7]
    %v18 = vld [vmem:[%s1] sm:$0x7]
    %v19 = vld [vmem:[%s1 + $0x4] sm:$0x7]
    %21 = vset.pattern.permute.xlu0 0
    %22 = vperm.xlu0 %21, %v18
    %v23 = vpop.permute.xlu0 %22
    %26 = vset.pattern.permute.xlu0 0
    %27 = vperm.xlu0 %26, %v19
    %v28 = vpop.permute.xlu0 %27
    %v30 = vmul.f32 %v23, %v17
    %v31 = vmul.f32 %v28, %v17
    %v32 = vld [vmem:[%s2] sm:$0x7]
    %v33 = vld [vmem:[%s2 + $0x4] sm:$0x7]
    %35 = vset.pattern.permute.xlu0 0
    %36 = vperm.xlu0 %35, %v32
    %v37 = vpop.permute.xlu0 %36
    %40 = vset.pattern.permute.xlu0 0
    %41 = vperm.xlu0 %40, %v33
    %v42 = vpop.permute.xlu0 %41
    %v44 = vadd.f32 %v30, %v37
    %v45 = vadd.f32 %v31, %v42
    %46 = vst [vmem:[%s4] sm:$0x7] %v44
    %47 = vst [vmem:[%s4 + $0x4] sm:$0x7] %v45
    %vm48 = vcmask 1042432
    %v49 = vsel %vm48, %v44, 0.0
    %v50 = vrot.slane %v49, 4
    %v51 = vadd.f32 %v49, %v50
    %v52 = vrot.slane %v51, 2
    %v53 = vadd.f32 %v51, %v52
    %v54 = vrot.slane %v53, 1
    %v55 = vadd.f32 %v53, %v54
    %v56 = vsel %vm48, %v45, 0.0
    %v57 = vrot.slane %v56, 4
    %v58 = vadd.f32 %v56, %v57
    %v59 = vrot.slane %v58, 2
    %v60 = vadd.f32 %v58, %v59
    %v61 = vrot.slane %v60, 1
    %v62 = vadd.f32 %v60, %v61
    %vm65 = vcmask 1041409
    %v66 = vsel %vm65, %v62, %v55
    %68 = vst [vmem:[#allocation2] sm:$0x3] %v66
    // Predicated region
    $region14: #{tpu_custom_call.1} parent=1 // pred_check
      _
    $region15: #{tpu_custom_call.1} parent=1 // pred_check_branch
      %70 = sbr.rel (0) target = $region17
    $region16: #{tpu_custom_call.1} parent=1 // pred_region
      %s72 = ssub.s32 32, 32
      %73 = vsyncadd [#allocation3], %s72
      %s75 = sshll.u32 [#allocation2], 4
      %s76 = int_to_ptr.vmem [resolvable:$true] %s75
      %78 = dma.vmem_to_hbm [thread:$0]  %s76, 32, %s3, [#allocation3]
    $region17: #{tpu_custom_call.1} parent=1 // pred_fallthru
      _
    // Predicated region
    $region18: #{tpu_custom_call.1} parent=1 // pred_check
      _
    $region19: #{tpu_custom_call.1} parent=1 // pred_check_branch
      %80 = sbr.rel (0) target = $region21
    $region20: #{tpu_custom_call.1} parent=1 // pred_region
      _
    $region21: #{tpu_custom_call.1} parent=1 // pred_fallthru
      _
    // Predicated region
    $region22: #{tpu_custom_call.1} parent=1 // pred_check
      _
    $region23: #{tpu_custom_call.1} parent=1 // pred_check_branch
      %82 = sbr.rel (0) target = $region25
    $region24: #{tpu_custom_call.1} parent=1 // pred_region
      %83 = dma.done [#allocation3], 32
    $region25: #{tpu_custom_call.1} parent=1 // pred_fallthru
      _
    // Predicated region
    $region26: #{tpu_custom_call.1} parent=1 // pred_check
      _
    $region27: #{tpu_custom_call.1} parent=1 // pred_check_branch
      %85 = sbr.rel (0) target = $region29
    $region28: #{tpu_custom_call.1} parent=1 // pred_region
      _
    $region29: #{tpu_custom_call.1} parent=1 // pred_fallthru
      _
    %86 = vsyncpa [#allocation3], 1

</llo_original>
